<compile_context>
chip_gen: v5e
topology: v5e:2x2
jax: 0.10.0
libtpu: 0.0.40
codegen_flags: <defaults>
</compile_context>

<pallas_src>
import functools

import jax
import jax.numpy as jnp
from jax.experimental import pallas as pl
from jax.experimental.pallas import tpu as pltpu


def _round_up(x, m):
    return ((x + m - 1) // m) * m


def _sublane_multiple(dtype):
    # f32 -> 8, bf16/fp16 -> 16, int8/fp8 -> 32 (packed sublane rows).
    itemsize = jnp.dtype(dtype).itemsize
    return max(8, 32 // max(itemsize, 1))


def _vmem_limit_bytes():
    """Scoped VMEM limit: half of physical VMEM, capped at 64 MiB.

    v5e/v6e (128 MiB physical) -> 64 MiB; v7x (64 MiB physical) -> 32 MiB.
    """
    try:
        cap = int(pltpu.get_tpu_info().vmem_capacity_bytes)
    except Exception:
        cap = 64 * 1024 * 1024  # conservative fallback
    return min(cap // 2, 64 * 1024 * 1024)


def _choose_batch_tile(n_rows, n_classes, itemsize, vmem_limit, mult):
    """Largest batch tile whose full VMEM working set fits the budget."""
    # Per-row VMEM cost of one batch tile:
    #   logits tile, double-buffered .................... 2 * C * itemsize
    #   f32 working set (x cast, exp temp, products) .... ~3 * C * 4
    #   targets tile (lane-padded (tb,1)->(tb,128)), x2 . 2 * 128 * 4
    bytes_per_row = 2 * n_classes * itemsize + 3 * n_classes * 4 + 2 * 128 * 4
    budget = (vmem_limit * 3) // 4            # headroom for alpha/outputs/code
    tb_budget = budget // max(bytes_per_row, 1)
    # DMA-size target: big enough that the ~0.35us per-grid-step overhead is
    # amortized against the HBM transfer time of the logits tile.
    target_tile_bytes = (4 * 1024 * 1024 if vmem_limit >= 64 * 1024 * 1024
                         else 2 * 1024 * 1024)
    tb_dma = target_tile_bytes // max(n_classes * itemsize, 1)
    tb = min(int(tb_budget), int(tb_dma))
    tb = max(tb - tb % mult, mult)            # full sublane groups
    tb = min(tb, _round_up(n_rows, mult))     # don't overshoot (padded) batch
    return tb


def _focal_partial_kernel(logits_ref, targets_ref, alpha_ref,
                          wsum_ref, wtot_ref, wsum_sc, wtot_sc):
    i = pl.program_id(1)

    # ---- init per-slice accumulators on the first batch tile ----
    @pl.when(i == 0)
    def _():
        wsum_sc[...] = jnp.zeros_like(wsum_sc)
        wtot_sc[...] = jnp.zeros_like(wtot_sc)

    x = logits_ref[...].astype(jnp.float32)       # [TB, C] (native dtype in HBM)
    t = targets_ref[...]                          # [TB, 1] int32
    a = alpha_ref[...]                            # [1,  C] f32
    c = x.shape[1]

    # Numerically-stable logsumexp over the class (lane) axis.
    m = jnp.max(x, axis=-1, keepdims=True)                                # [TB, 1]
    lse = m + jnp.log(jnp.sum(jnp.exp(x - m), axis=-1, keepdims=True))    # [TB, 1]

    # Fused target gather + weighted NLL as whole-tile masked reductions.
    # (1, C) iota broadcasts against (TB, 1) targets on the VPU; no [TB, C]
    # int32 temporary and no per-row x_t/a_t/nll intermediates.
    class_ids = jax.lax.broadcasted_iota(jnp.int32, (1, c), 1)            # [1, C]
    hit = class_ids == t                                                  # [TB, C]
    # Padded rows carry target = C which never matches a class id, so they
    # contribute 0 to both sums.
    wsum_sc[...] += jnp.sum(jnp.where(hit, a * (lse - x), 0.0))
    wtot_sc[...] += jnp.sum(jnp.where(hit, a, 0.0))

    # ---- write this slice's partial sums on the last batch tile ----
    @pl.when(i == pl.num_programs(1) - 1)
    def _():
        wsum_ref[...] = jnp.broadcast_to(wsum_sc[...], wsum_ref.shape)
        wtot_ref[...] = jnp.broadcast_to(wtot_sc[...], wtot_ref.shape)


def focal_loss_with_cross_entropy(inputs, targets, alpha, gamma=2.0,
                                  reduction="mean", tile_rows=None):
    """inputs: [B, C] float (any dtype); targets: [B] int; alpha: [C] -> scalar."""
    assert reduction in ("mean", "sum")
    B, C = inputs.shape
    targets_2d = targets.astype(jnp.int32).reshape(B, 1)
    alpha_2d = jnp.asarray(alpha, jnp.float32).reshape(1, C)

    itemsize = jnp.dtype(inputs.dtype).itemsize
    vmem_limit = _vmem_limit_bytes()
    mult = _sublane_multiple(inputs.dtype)
    if tile_rows is None:
        tb = _choose_batch_tile(B, C, itemsize, vmem_limit, mult)
    else:
        tb = max(_round_up(int(tile_rows), mult), mult)

    # Split the batch tiles over a leading "parallel" grid axis so that v7x's
    # two TensorCores each reduce their own slice into private partial sums.
    n_tiles = -(-B // tb)
    n_slices = 2 if n_tiles >= 2 else 1
    steps = -(-n_tiles // n_slices)
    B_pad = n_slices * steps * tb
    if B_pad != B:
        inputs = jnp.pad(inputs, ((0, B_pad - B), (0, 0)))
        targets_2d = jnp.pad(targets_2d, ((0, B_pad - B), (0, 0)),
                             constant_values=C)   # never matches a class id

    grid = (n_slices, steps)
    cost = pl.CostEstimate(
        flops=int(5 * B_pad * C),
        transcendentals=int(B_pad * C + B_pad),
        bytes_accessed=int(B_pad * C * itemsize + B_pad * 4 + C * 4
                           + 2 * n_slices * 128 * 4))

    wsum, wtot = pl.pallas_call(
        _focal_partial_kernel,
        out_shape=(jax.ShapeDtypeStruct((n_slices, 1, 128), jnp.float32),
                   jax.ShapeDtypeStruct((n_slices, 1, 128), jnp.float32)),
        grid=grid,
        in_specs=[
            pl.BlockSpec((tb, C), lambda p, i: (p * steps + i, 0)),  # logits tile
            pl.BlockSpec((tb, 1), lambda p, i: (p * steps + i, 0)),  # targets tile
            pl.BlockSpec((1, C), lambda p, i: (0, 0)),               # alpha resident
        ],
        out_specs=[
            pl.BlockSpec((1, 1, 128), lambda p, i: (p, 0, 0)),       # per-slice wsum
            pl.BlockSpec((1, 1, 128), lambda p, i: (p, 0, 0)),       # per-slice wtot
        ],
        scratch_shapes=[pltpu.VMEM((1, 1), jnp.float32),             # weighted nll sum
                        pltpu.VMEM((1, 1), jnp.float32)],            # weight sum
        compiler_params=pltpu.CompilerParams(
            dimension_semantics=("parallel", "arbitrary"),
            vmem_limit_bytes=vmem_limit),
        cost_estimate=cost,
    )(inputs, targets_2d, alpha_2d)

    # Tiny scalar epilogue: combine per-slice partials, apply reduction and the
    # focal transform (all scalar ops, outside the kernel by design).
    ws = jnp.sum(wsum[:, 0, 0])
    wt = jnp.sum(wtot[:, 0, 0])
    if reduction == "mean":
        ce = ws / wt      # NaN if all present-class alpha weights are 0 (matches PyTorch)
    else:
        ce = ws
    pt = jnp.exp(-ce)
    one_minus_pt = 1.0 - pt
    g = float(gamma)
    if g.is_integer() and g >= 0:             # integer gamma: multiply chain, no pow
        mod = jnp.ones_like(ce)
        for _ in range(int(g)):
            mod = mod * one_minus_pt
    else:
        mod = one_minus_pt ** g
    return mod * ce


if __name__ == "__main__":
    key = jax.random.PRNGKey(0)
    k_logits, k_targets = jax.random.split(key)

    batch, num_classes = 8, 4
    inputs = jax.random.normal(k_logits, (batch, num_classes), dtype=jnp.float32)
    targets = jax.random.randint(k_targets, (batch,), 0, num_classes,
                                 dtype=jnp.int32)
    # Deterministic per-class alpha weights (module's __init__ takes these).
    alpha = jnp.array([0.25, 0.5, 0.75, 1.0], dtype=jnp.float32)

    def reference(x, t, a, gamma, reduction):
        logp = jax.nn.log_softmax(x.astype(jnp.float32), axis=-1)
        nll = -jnp.take_along_axis(logp, t[:, None], axis=-1)[:, 0]
        w = a[t]
        if reduction == "mean":
            ce = jnp.sum(w * nll) / jnp.sum(w)
        else:
            ce = jnp.sum(w * nll)
        return (1.0 - jnp.exp(-ce)) ** gamma * ce

    # mean reduction, f32 ingest
    loss = focal_loss_with_cross_entropy(inputs, targets, alpha,
                                         gamma=2, reduction="mean")
    jax.block_until_ready(loss)
    ref = reference(inputs, targets, alpha, 2.0, "mean")
    assert jnp.allclose(loss, ref, rtol=1e-5, atol=1e-6), (loss, ref)

    # sum reduction
    loss_s = focal_loss_with_cross_entropy(inputs, targets, alpha,
                                           gamma=2, reduction="sum")
    jax.block_until_ready(loss_s)
    ref_s = reference(inputs, targets, alpha, 2.0, "sum")
    assert jnp.allclose(loss_s, ref_s, rtol=1e-5, atol=1e-6), (loss_s, ref_s)

    # Native-bf16 ingest (no wrapper up-cast; kernel casts to f32 internally).
    loss_bf16 = focal_loss_with_cross_entropy(inputs.astype(jnp.bfloat16),
                                              targets, alpha,
                                              gamma=2, reduction="mean")
    jax.block_until_ready(loss_bf16)
    ref_bf16 = reference(inputs.astype(jnp.bfloat16), targets, alpha, 2.0, "mean")
    assert jnp.allclose(loss_bf16, ref_bf16, rtol=5e-2, atol=5e-3), (loss_bf16,
                                                                     ref_bf16)

    # Multi-tile + dual-slice ("parallel") path with batch padding, forced
    # small tile to exercise accumulation / padding / slice combine.
    B2, C2 = 384, 8
    k1, k2 = jax.random.split(jax.random.PRNGKey(0))
    x2 = jax.random.normal(k1, (B2, C2), dtype=jnp.float32)
    t2 = jax.random.randint(k2, (B2,), 0, C2, dtype=jnp.int32)
    a2 = jnp.linspace(0.1, 1.0, C2, dtype=jnp.float32)
    loss2 = focal_loss_with_cross_entropy(x2, t2, a2, gamma=3,
                                          reduction="mean", tile_rows=128)
    jax.block_until_ready(loss2)
    ref2 = reference(x2, t2, a2, 3.0, "mean")
    assert jnp.allclose(loss2, ref2, rtol=1e-4, atol=1e-5), (loss2, ref2)

    print("KERNEL_OK")
</pallas_src>

<mosaic_0001>
module attributes {stable_mosaic.version = 11 : i64} {
  func.func @_focal_partial_kernel(%arg0: i32, %arg1: i32, %arg2: memref<8x4xf32, #tpu.memory_space<vmem>>, %arg3: memref<8x1xi32, #tpu.memory_space<vmem>>, %arg4: memref<1x4xf32, #tpu.memory_space<vmem>>, %arg5: memref<1x1x128xf32, #tpu.memory_space<vmem>>, %arg6: memref<1x1x128xf32, #tpu.memory_space<vmem>>, %arg7: memref<1x1xf32, #tpu.memory_space<vmem>>, %arg8: memref<1x1xf32, #tpu.memory_space<vmem>>) attributes {dimension_semantics = [#tpu.dimension_semantics<parallel>, #tpu.dimension_semantics<arbitrary>], iteration_bounds = array<i64: 1, 1>, scalar_prefetch = 0 : i64, scratch_operands = 2 : i64, tpu.core_type = #tpu.core_type<tc>, window_params = [{transform_indices = @transform_0, window_bounds = array<i64: 8, 4>}, {transform_indices = @transform_1, window_bounds = array<i64: 8, 1>}, {pipeline_mode = #tpu.pipeline_mode<synchronous>, transform_indices = @transform_2, window_bounds = array<i64: 1, 4>}, {transform_indices = @transform_3, window_bounds = array<i64: 1, 1, 128>}, {transform_indices = @transform_4, window_bounds = array<i64: 1, 1, 128>}]} {
    %c0_i32 = arith.constant 0 : i32
    %0 = arith.cmpi eq, %arg1, %c0_i32 : i32
    %1 = arith.extui %0 : i1 to i32
    %c0_i32_0 = arith.constant 0 : i32
    %2 = arith.cmpi ne, %1, %c0_i32_0 : i32
    scf.if %2 {
      %cst_21 = arith.constant 0.000000e+00 : f32
      %48 = vector.broadcast %cst_21 : f32 to vector<1x1xf32>
      %c0_22 = arith.constant 0 : index
      %c0_23 = arith.constant 0 : index
      %49 = vector.load %arg7[%c0_22, %c0_23] : memref<1x1xf32, #tpu.memory_space<vmem>>, vector<1x1xf32>
      tpu.vector_store %arg7[%c0_22, %c0_23], %48 {strides = array<i32>} : memref<1x1xf32, #tpu.memory_space<vmem>>, vector<1x1xf32>,
      %cst_24 = arith.constant 0.000000e+00 : f32
      %50 = vector.broadcast %cst_24 : f32 to vector<1x1xf32>
      %c0_25 = arith.constant 0 : index
      %c0_26 = arith.constant 0 : index
      %51 = vector.load %arg8[%c0_25, %c0_26] : memref<1x1xf32, #tpu.memory_space<vmem>>, vector<1x1xf32>
      tpu.vector_store %arg8[%c0_25, %c0_26], %50 {strides = array<i32>} : memref<1x1xf32, #tpu.memory_space<vmem>>, vector<1x1xf32>,
    } else {
    }
    %c0 = arith.constant 0 : index
    %c0_1 = arith.constant 0 : index
    %3 = vector.load %arg2[%c0, %c0_1] : memref<8x4xf32, #tpu.memory_space<vmem>>, vector<8x4xf32>
    %c0_2 = arith.constant 0 : index
    %c0_3 = arith.constant 0 : index
    %4 = vector.load %arg3[%c0_2, %c0_3] : memref<8x1xi32, #tpu.memory_space<vmem>>, vector<8x1xi32>
    %c0_4 = arith.constant 0 : index
    %c0_5 = arith.constant 0 : index
    %5 = vector.load %arg4[%c0_4, %c0_5] : memref<1x4xf32, #tpu.memory_space<vmem>>, vector<1x4xf32>
    %cst = arith.constant dense<0xFF800000> : vector<8xf32>
    %6 = vector.multi_reduction <maximumf>, %3, %cst [1] : vector<8x4xf32> to vector<8xf32>
    %7 = vector.shape_cast %6 : vector<8xf32> to vector<8x1xf32>
    %8 = vector.broadcast %7 : vector<8x1xf32> to vector<8x4xf32>
    %9 = arith.subf %3, %8 : vector<8x4xf32>
    %10 = math.exp %9 : vector<8x4xf32>
    %cst_6 = arith.constant dense<0.000000e+00> : vector<8xf32>
    %11 = vector.multi_reduction <add>, %10, %cst_6 [1] : vector<8x4xf32> to vector<8xf32>
    %12 = vector.shape_cast %11 : vector<8xf32> to vector<8x1xf32>
    %13 = math.log %12 : vector<8x1xf32>
    %14 = arith.addf %7, %13 : vector<8x1xf32>
    %15 = tpu.iota {dimensions = array<i32: 1>} : vector<1x4xi32>
    %16 = vector.broadcast %15 : vector<1x4xi32> to vector<8x4xi32>
    %17 = vector.broadcast %4 : vector<8x1xi32> to vector<8x4xi32>
    %18 = arith.cmpi eq, %16, %17 : vector<8x4xi32>
    %c0_7 = arith.constant 0 : index
    %c0_8 = arith.constant 0 : index
    %19 = vector.load %arg7[%c0_7, %c0_8] : memref<1x1xf32, #tpu.memory_space<vmem>>, vector<1x1xf32>
    %20 = vector.broadcast %14 : vector<8x1xf32> to vector<8x4xf32>
    %21 = arith.subf %20, %3 : vector<8x4xf32>
    %22 = vector.broadcast %5 : vector<1x4xf32> to vector<8x4xf32>
    %23 = arith.mulf %22, %21 : vector<8x4xf32>
    %cst_9 = arith.constant 0.000000e+00 : f32
    %24 = vector.broadcast %cst_9 : f32 to vector<8x4xf32>
    %25 = arith.select %18, %23, %24 : vector<8x4xi1>, vector<8x4xf32>
    %26 = vector.shape_cast %25 : vector<8x4xf32> to vector<1x8x4xf32>
    %cst_10 = arith.constant dense<0.000000e+00> : vector<1xf32>
    %27 = vector.multi_reduction <add>, %26, %cst_10 [1, 2] : vector<1x8x4xf32> to vector<1xf32>
    %28 = vector.shape_cast %27 : vector<1xf32> to vector<1x1x1xf32>
    %29 = vector.extract %28[0, 0, 0] : f32 from vector<1x1x1xf32>
    %30 = vector.broadcast %29 : f32 to vector<1x1xf32>
    %31 = arith.addf %19, %30 : vector<1x1xf32>
    %c0_11 = arith.constant 0 : index
    %c0_12 = arith.constant 0 : index
    %32 = vector.load %arg7[%c0_11, %c0_12] : memref<1x1xf32, #tpu.memory_space<vmem>>, vector<1x1xf32>
    tpu.vector_store %arg7[%c0_11, %c0_12], %31 {strides = array<i32>} : memref<1x1xf32, #tpu.memory_space<vmem>>, vector<1x1xf32>,
    %c0_13 = arith.constant 0 : index
    %c0_14 = arith.constant 0 : index
    %33 = vector.load %arg8[%c0_13, %c0_14] : memref<1x1xf32, #tpu.memory_space<vmem>>, vector<1x1xf32>
    %cst_15 = arith.constant 0.000000e+00 : f32
    %34 = vector.shape_cast %5 : vector<1x4xf32> to vector<1x4xf32>
    %35 = vector.broadcast %34 : vector<1x4xf32> to vector<8x4xf32>
    %36 = vector.broadcast %cst_15 : f32 to vector<8x4xf32>
    %37 = arith.select %18, %35, %36 : vector<8x4xi1>, vector<8x4xf32>
    %38 = vector.shape_cast %37 : vector<8x4xf32> to vector<1x8x4xf32>
    %cst_16 = arith.constant dense<0.000000e+00> : vector<1xf32>
    %39 = vector.multi_reduction <add>, %38, %cst_16 [1, 2] : vector<1x8x4xf32> to vector<1xf32>
    %40 = vector.shape_cast %39 : vector<1xf32> to vector<1x1x1xf32>
    %41 = vector.extract %40[0, 0, 0] : f32 from vector<1x1x1xf32>
    %42 = vector.broadcast %41 : f32 to vector<1x1xf32>
    %43 = arith.addf %33, %42 : vector<1x1xf32>
    %c0_17 = arith.constant 0 : index
    %c0_18 = arith.constant 0 : index
    %44 = vector.load %arg8[%c0_17, %c0_18] : memref<1x1xf32, #tpu.memory_space<vmem>>, vector<1x1xf32>
    tpu.vector_store %arg8[%c0_17, %c0_18], %43 {strides = array<i32>} : memref<1x1xf32, #tpu.memory_space<vmem>>, vector<1x1xf32>,
    %c0_i32_19 = arith.constant 0 : i32
    %45 = arith.cmpi eq, %arg1, %c0_i32_19 : i32
    %46 = arith.extui %45 : i1 to i32
    %c0_i32_20 = arith.constant 0 : i32
    %47 = arith.cmpi ne, %46, %c0_i32_20 : i32
    scf.if %47 {
      %c0_21 = arith.constant 0 : index
      %c0_22 = arith.constant 0 : index
      %48 = vector.load %arg7[%c0_21, %c0_22] : memref<1x1xf32, #tpu.memory_space<vmem>>, vector<1x1xf32>
      %49 = vector.shape_cast %48 : vector<1x1xf32> to vector<1x1x1xf32>
      %50 = vector.broadcast %49 : vector<1x1x1xf32> to vector<1x1x128xf32>
      %c0_23 = arith.constant 0 : index
      %c0_24 = arith.constant 0 : index
      %c0_25 = arith.constant 0 : index
      %51 = vector.load %arg5[%c0_23, %c0_24, %c0_25] : memref<1x1x128xf32, #tpu.memory_space<vmem>>, vector<1x1x128xf32>
      tpu.vector_store %arg5[%c0_23, %c0_24, %c0_25], %50 {strides = array<i32>} : memref<1x1x128xf32, #tpu.memory_space<vmem>>, vector<1x1x128xf32>,
      %c0_26 = arith.constant 0 : index
      %c0_27 = arith.constant 0 : index
      %52 = vector.load %arg8[%c0_26, %c0_27] : memref<1x1xf32, #tpu.memory_space<vmem>>, vector<1x1xf32>
      %53 = vector.shape_cast %52 : vector<1x1xf32> to vector<1x1x1xf32>
      %54 = vector.broadcast %53 : vector<1x1x1xf32> to vector<1x1x128xf32>
      %c0_28 = arith.constant 0 : index
      %c0_29 = arith.constant 0 : index
      %c0_30 = arith.constant 0 : index
      %55 = vector.load %arg6[%c0_28, %c0_29, %c0_30] : memref<1x1x128xf32, #tpu.memory_space<vmem>>, vector<1x1x128xf32>
      tpu.vector_store %arg6[%c0_28, %c0_29, %c0_30], %54 {strides = array<i32>} : memref<1x1x128xf32, #tpu.memory_space<vmem>>, vector<1x1x128xf32>,
    } else {
    }
    return
  }
  func.func @transform_0(%arg0: i32, %arg1: i32) -> (i32, i32) {
    %c1_i32 = arith.constant 1 : i32
    %0 = arith.muli %arg0, %c1_i32 : i32
    %1 = arith.addi %0, %arg1 : i32
    %c0_i32 = arith.constant 0 : i32
    %c0_i32_0 = arith.constant 0 : i32
    return %1, %c0_i32 : i32, i32
  }
  func.func @transform_1(%arg0: i32, %arg1: i32) -> (i32, i32) {
    %c1_i32 = arith.constant 1 : i32
    %0 = arith.muli %arg0, %c1_i32 : i32
    %1 = arith.addi %0, %arg1 : i32
    %c0_i32 = arith.constant 0 : i32
    %c0_i32_0 = arith.constant 0 : i32
    return %1, %c0_i32 : i32, i32
  }
  func.func @transform_2(%arg0: i32, %arg1: i32) -> (i32, i32) {
    %c0_i32 = arith.constant 0 : i32
    %c0_i32_0 = arith.constant 0 : i32
    %c0_i32_1 = arith.constant 0 : i32
    return %c0_i32, %c0_i32_0 : i32, i32
  }
  func.func @transform_3(%arg0: i32, %arg1: i32) -> (i32, i32, i32) {
    %c0_i32 = arith.constant 0 : i32
    %c0_i32_0 = arith.constant 0 : i32
    %c0_i32_1 = arith.constant 0 : i32
    return %arg0, %c0_i32, %c0_i32_0 : i32, i32, i32
  }
  func.func @transform_4(%arg0: i32, %arg1: i32) -> (i32, i32, i32) {
    %c0_i32 = arith.constant 0 : i32
    %c0_i32_0 = arith.constant 0 : i32
    %c0_i32_1 = arith.constant 0 : i32
    return %arg0, %c0_i32, %c0_i32_0 : i32, i32, i32
  }
}

</mosaic_0001>

<llo_original>
// kernel: tpu_custom_call.1
$region0: #{tpu_custom_call.1}
  #allocation0 [shape = 'u32[]', space=smem, size = 0x4, offset = 0x4, fixed_abs, tag = 'smem constant byte address 0x4 - core index']
  #allocation1 [shape = 'u32[72,128]{1,0:T(1,128)}', space=vmem, size = 0x9000, scoped, tag = 'internal scratch']
  #allocation2 [shape = 'f32[1,1]{1,0:T(1,128)}', space=vmem, size = 0x200, scoped, tag = 'scratch operand']
  #allocation3 [shape = 'f32[1,1]{1,0:T(1,128)}', space=vmem, size = 0x200, scoped, tag = 'scratch operand']
  %s0 = inlined_call_operand.vmem [shape: f32[8,4], index: 0, kind: input, shape index: {}]
  %s1 = inlined_call_operand.vmem [shape: s32[8,1], index: 1, kind: input, shape index: {}]
  %s2 = inlined_call_operand.vmem [shape: f32[1,4], index: 2, kind: input, shape index: {}]
  %s3 = inlined_call_operand.hbm [shape: f32[1,1,128], index: 3, kind: output, shape index: {0}]
  %s4 = inlined_call_operand.hbm [shape: f32[1,1,128], index: 4, kind: output, shape index: {1}]
  %5 = xla_tuple %s3, %s4
  %s6 = sld [smem:[#allocation0]]
  $region38: #{tpu_custom_call.1} parent=0
    _
  %s8 = ssub.s32 1, %s6
  %s9 = scalar_select 0, %s8, %s6
  $region1: #{tpu_custom_call.1} parent=0
    #allocation4 [shape = 'u8[512]{0}', space=vmem, size = 0x400, scoped, tag = 'output window, operand 0, single buffered']
    #allocation5 [shape = 's32[1]{0}', space=sflag, size = 0x4, scoped, tag = 'scoped memory for tpu_custom_call.1']
    #allocation6 [shape = 'u8[512]{0}', space=vmem, size = 0x400, scoped, tag = 'output window, operand 1, single buffered']
    #allocation7 [shape = 's32[1]{0}', space=sflag, size = 0x4, scoped, tag = 'scoped memory for tpu_custom_call.1']
    %10 = vsyncpa [#allocation5], 0
    %11 = vsyncpa [#allocation7], 0
    // Predicated region
    $region2: #{tpu_custom_call.1} parent=1 // pred_check
      _
    $region3: #{tpu_custom_call.1} parent=1 // pred_check_branch
      %13 = sbr.rel (0) target = $region5
    $region4: #{tpu_custom_call.1} parent=1 // pred_region
      %s14 = sadd.s32 0, 0
      %p15 = scmp.lt.s32.totalorder %s14, 0
      %s16 = scalar_select %p15, %s14, 0
      %s17 = smul.addr %s16, 8
      %s18 = scalar_lea.vmem %s0, %s17
      %s19 = sadd.s32 0, 0
    $region5: #{tpu_custom_call.1} parent=1 // pred_fallthru
      _
    // Predicated region
    $region6: #{tpu_custom_call.1} parent=1 // pred_check
      _
    $region7: #{tpu_custom_call.1} parent=1 // pred_check_branch
      %21 = sbr.rel (0) target = $region9
    $region8: #{tpu_custom_call.1} parent=1 // pred_region
      %s22 = sadd.s32 0, 0
      %p23 = scmp.lt.s32.totalorder %s22, 0
      %s24 = scalar_select %p23, %s22, 0
      %s25 = smul.addr %s24, 8
      %s26 = scalar_lea.vmem %s1, %s25
      %s27 = sadd.s32 0, 0
    $region9: #{tpu_custom_call.1} parent=1 // pred_fallthru
      _
    // Predicated region
    $region10: #{tpu_custom_call.1} parent=1 // pred_check
      _
    $region11: #{tpu_custom_call.1} parent=1 // pred_check_branch
      %29 = sbr.rel (0) target = $region13
    $region12: #{tpu_custom_call.1} parent=1 // pred_region
      _
    $region13: #{tpu_custom_call.1} parent=1 // pred_fallthru
      _
    %s30 = sadd.s32 0, 0
    %p31 = scmp.lt.s32.totalorder %s30, 0
    %s32 = scalar_select %p31, %s30, 0
    %s33 = smul.addr %s32, 8
    %s34 = scalar_lea.vmem %s0, %s33
    %s35 = sadd.s32 0, 0
    %p36 = scmp.lt.s32.totalorder %s35, 0
    %s37 = scalar_select %p36, %s35, 0
    %s38 = smul.addr %s37, 8
    %s39 = scalar_lea.vmem %s1, %s38
    %s40 = sadd.s32 0, 0
    %p41 = scmp.lt.s32.totalorder %s40, 0
    %s42 = scalar_select %p41, %s40, 0
    %s43 = smul.addr %s42, 8
    %s44 = scalar_lea.vmem %s0, %s43
    %s45 = sadd.s32 0, 0
    %s46 = sadd.s32 0, 0
    %p47 = scmp.lt.s32.totalorder %s46, 0
    %s48 = scalar_select %p47, %s46, 0
    %s49 = smul.addr %s48, 8
    %s50 = scalar_lea.vmem %s1, %s49
    %s51 = sadd.s32 0, 0
    %p52 = scmp.eq.s32.totalorder 0, 0
    // Predicated region
    $region14: #{tpu_custom_call.1} parent=1 // pred_check
      %p53 = pneg %p52
    $region15: #{tpu_custom_call.1} parent=1 // pred_check_branch
      %55 = sbr.rel (%p53) target = $region17
    $region16: #{tpu_custom_call.1} parent=1 // pred_region
      %vm56 = vcmask 0
      %57 = vst.msk [vmem:[#allocation2] sm:$0x1] %vm56, 0.0
      %58 = vst.msk [vmem:[#allocation3] sm:$0x1] %vm56, 0.0
    $region17: #{tpu_custom_call.1} parent=1 // pred_fallthru
      _
    %v59 = vld [vmem:[%s44] sm:$0xff]
    %v60 = vld [vmem:[%s50] sm:$0xff]
    %v61 = vld [vmem:[%s2] sm:$0x1]
    %vm62 = vcmask 31744
    %v63 = vsel %vm62, %v59, -inf
    %64 = vmax.xlane.f32.xlu0 %v63
    %v65 = vpop.xlane.xlu0 %64
    %v66 = vsub.f32 %v59, %v65
    %v67 = vmul.f32 %v66, 1.442695
    %v68 = vpow.pop %v67
    %v69 = vsel %vm62, %v68, 0.0
    %70 = vadd.xlane.f32.xlu0 %v69
    %v71 = vpop.xlane.xlu0 %70
    %v72 = vlog2.pop %v71
    %v73 = vmul.f32 %v72, 0.6931472
    %v74 = vadd.f32 %v65, %v73
    %v75 = vlaneseq
    %v76 = vand.u32 %v75, 127
    %77 = vset.pattern.permute.xlu0 0
    %78 = vperm.xlu0 %77, %v60
    %v79 = vpop.permute.xlu0 %78
    %vm80 = vcmp.eq.s32.totalorder %v76, %v79
    %v81 = vld [vmem:[#allocation2] sm:$0x1]
    %v82 = vsub.f32 %v74, %v59
    %v84 = vperm.slane %v61, 0
    %v86 = vmul.f32 %v84, %v82
    %v87 = vsel %vm80, %v86, 0.0
    %v88 = vsel %vm62, %v87, 0.0
    %89 = vadd.xlane.f32.xlu0 %v88
    %v90 = vpop.xlane.xlu0 %89
    %v91 = vrot.slane %v90, 4
    %v92 = vadd.f32 %v90, %v91
    %v93 = vrot.slane %v92, 2
    %v94 = vadd.f32 %v92, %v93
    %v95 = vrot.slane %v94, 1
    %v96 = vadd.f32 %v94, %v95
    %s97 = vtos %v96
    %v98 = vstv %s97
    %v99 = vadd.f32 %v81, %v98
    %vm100 = vcmask 0
    %101 = vst.msk [vmem:[#allocation2] sm:$0x1] %vm100, %v99
    %v102 = vld [vmem:[#allocation3] sm:$0x1]
    %v103 = vsel %vm80, %v84, 0.0
    %v104 = vsel %vm62, %v103, 0.0
    %105 = vadd.xlane.f32.xlu0 %v104
    %v106 = vpop.xlane.xlu0 %105
    %v107 = vrot.slane %v106, 4
    %v108 = vadd.f32 %v106, %v107
    %v109 = vrot.slane %v108, 2
    %v110 = vadd.f32 %v108, %v109
    %v111 = vrot.slane %v110, 1
    %v112 = vadd.f32 %v110, %v111
    %s113 = vtos %v112
    %v114 = vstv %s113
    %v115 = vadd.f32 %v102, %v114
    %116 = vst.msk [vmem:[#allocation3] sm:$0x1] %vm100, %v115
    // Predicated region
    $region18: #{tpu_custom_call.1} parent=1 // pred_check
      %p117 = pneg %p52
    $region19: #{tpu_custom_call.1} parent=1 // pred_check_branch
      %119 = sbr.rel (%p117) target = $region21
    $region20: #{tpu_custom_call.1} parent=1 // pred_region
      %v120 = vld [vmem:[#allocation2] sm:$0x1]
      %122 = vset.pattern.permute.xlu0 0
      %123 = vperm.xlu0 %122, %v120
      %v124 = vpop.permute.xlu0 %123
      %v126 = vperm.slane %v124, 0
      %127 = vst [vmem:[#allocation4] sm:$0x1] %v126
      %v128 = vld [vmem:[#allocation3] sm:$0x1]
      %130 = vset.pattern.permute.xlu0 0
      %131 = vperm.xlu0 %130, %v128
      %v132 = vpop.permute.xlu0 %131
      %v134 = vperm.slane %v132, 0
      %135 = vst [vmem:[#allocation6] sm:$0x1] %v134
    $region21: #{tpu_custom_call.1} parent=1 // pred_fallthru
      _
    // Predicated region
    $region22: #{tpu_custom_call.1} parent=1 // pred_check
      _
    $region23: #{tpu_custom_call.1} parent=1 // pred_check_branch
      %137 = sbr.rel (0) target = $region25
    $region24: #{tpu_custom_call.1} parent=1 // pred_region
      %139 = vsyncadd [#allocation5], 0
      %s141 = sshll.u32 [#allocation4], 4
      %s142 = int_to_ptr.vmem [resolvable:$true] %s141
      %s143 = sshll.u32 %s3, 4
      %s144 = int_to_ptr.hbm [resolvable:$true] %s143
      %146 = dma.vmem_to_hbm [thread:$0]  %s142, 16, %s144, [#allocation5]
    $region25: #{tpu_custom_call.1} parent=1 // pred_fallthru
      _
    // Predicated region
    $region26: #{tpu_custom_call.1} parent=1 // pred_check
      _
    $region27: #{tpu_custom_call.1} parent=1 // pred_check_branch
      %148 = sbr.rel (0) target = $region29
    $region28: #{tpu_custom_call.1} parent=1 // pred_region
      %150 = vsyncadd [#allocation7], 0
      %s152 = sshll.u32 [#allocation6], 4
      %s153 = int_to_ptr.vmem [resolvable:$true] %s152
      %s154 = sshll.u32 %s4, 4
      %s155 = int_to_ptr.hbm [resolvable:$true] %s154
      %157 = dma.vmem_to_hbm [thread:$0]  %s153, 16, %s155, [#allocation7]
    $region29: #{tpu_custom_call.1} parent=1 // pred_fallthru
      _
    // Predicated region
    $region30: #{tpu_custom_call.1} parent=1 // pred_check
      _
    $region31: #{tpu_custom_call.1} parent=1 // pred_check_branch
      %159 = sbr.rel (0) target = $region33
    $region32: #{tpu_custom_call.1} parent=1 // pred_region
      %161 = dma.done [#allocation5], 16
    $region33: #{tpu_custom_call.1} parent=1 // pred_fallthru
      _
    // Predicated region
    $region34: #{tpu_custom_call.1} parent=1 // pred_check
      _
    $region35: #{tpu_custom_call.1} parent=1 // pred_check_branch
      %163 = sbr.rel (0) target = $region37
    $region36: #{tpu_custom_call.1} parent=1 // pred_region
      %165 = dma.done [#allocation7], 16
    $region37: #{tpu_custom_call.1} parent=1 // pred_fallthru
      _
    %166 = vsyncpa [#allocation5], 1
    %167 = vsyncpa [#allocation7], 1

</llo_original>
